<compile_context>
chip_gen: v5e
topology: v5e:2x2
jax: 0.10.0
libtpu: 0.0.40
codegen_flags: <defaults>
</compile_context>

<pallas_src>
import functools

import jax
import jax.numpy as jnp
from jax.experimental import pallas as pl
from jax.experimental.pallas import tpu as pltpu


def _round_up(x, m):
    return ((x + m - 1) // m) * m


def _nbytes(a):
    return a.size * a.dtype.itemsize


def _dqn_kernel(x_ref, w1_ref, b1_ref, w2_ref, b2_ref, w3_ref, b3_ref, out_ref):
    # In-kernel f32 -> bf16 cast of the streamed activation tile (free VPU filler).
    x = x_ref[...].astype(w1_ref.dtype)
    # fc1 + ReLU   (bf16 operands, f32 accumulate; bias/ReLU in f32 on the VPU)
    h1 = jnp.dot(x, w1_ref[...], preferred_element_type=jnp.float32)
    h1 = jnp.maximum(h1 + b1_ref[...], 0.0)
    # fc2 + ReLU   (hidden2 zero-padded 64 -> 128 at init; padded cols stay 0)
    h2 = jnp.dot(h1.astype(w2_ref.dtype), w2_ref[...],
                 preferred_element_type=jnp.float32)
    h2 = jnp.maximum(h2 + b2_ref[...], 0.0)
    # fc3 (no activation); padded w3 rows are zero so they contribute nothing.
    q = jnp.dot(h2.astype(w3_ref.dtype), w3_ref[...],
                preferred_element_type=jnp.float32)
    out_ref[...] = (q + b3_ref[...]).astype(out_ref.dtype)


def init_dqn_params(key, input_size, output_size):
    """Deterministic f32 init mimicking nn.Linear default (uniform +/- 1/sqrt(fan_in))."""
    dims = [(input_size, 128), (128, 64), (64, output_size)]
    params = []
    for (fan_in, fan_out) in dims:
        key, kw, kb = jax.random.split(key, 3)
        bound = 1.0 / jnp.sqrt(jnp.float32(fan_in))
        w = jax.random.uniform(kw, (fan_in, fan_out), jnp.float32, -bound, bound)
        # biases kept 2D (1, out) for clean TPU layout / in-kernel broadcast
        b = jax.random.uniform(kb, (1, fan_out), jnp.float32, -bound, bound)
        params.extend([w, b])
    return params


def prepare_dqn_params(w1, b1, w2, b2, w3, b3, compute_dtype=jnp.bfloat16):
    """One-time (init-time) pad + cast so the per-step forward launches a single kernel.

    * hidden2 padded 64 -> 128 (zero cols / zero bias / zero w3 rows): keeps fc3's
      K dimension a full 128 MXU tile; numerically exact.
    * weights cast to bf16 (MXU operands); biases stay f32 for the VPU add.
    """
    h2_size = w2.shape[1]
    h2_pad = _round_up(h2_size, 128)
    w2p = jnp.pad(w2, ((0, 0), (0, h2_pad - h2_size)))
    b2p = jnp.pad(b2, ((0, 0), (0, h2_pad - h2_size)))
    w3p = jnp.pad(w3, ((0, h2_pad - h2_size), (0, 0)))
    return (w1.astype(compute_dtype), b1.astype(jnp.float32),
            w2p.astype(compute_dtype), b2p.astype(jnp.float32),
            w3p.astype(compute_dtype), b3.astype(jnp.float32))


@functools.partial(jax.jit, static_argnames=("block_batch",))
def dqn_forward(x, w1c, b1, w2c, b2p, w3c, b3, *, block_batch=2048):
    """Fused DQN forward. Expects params already run through prepare_dqn_params."""
    batch, in_size = x.shape
    h1_size = w1c.shape[1]      # 128
    h2_pad = w2c.shape[1]       # 128 (padded)
    out_size = w3c.shape[1]     # e.g. 4 actions (stored narrow, no lane padding)

    # --- batch tiling: multiple of 16 for bf16 sublane packing; cap keeps the
    # tile comfortably inside v7x's 64 MiB VMEM (and v5e's 16 MiB scoped default)
    tb = min(_round_up(min(block_batch, batch), 16), 4096)
    padded_batch = _round_up(batch, tb)
    if padded_batch != batch:
        x = jnp.pad(x, ((0, padded_batch - batch), (0, 0)))
    grid = (padded_batch // tb,)

    # Weights/biases: VMEM-resident (constant index_map -> no re-DMA across steps).
    resident = lambda a: pl.BlockSpec(a.shape, lambda i: (0,) * a.ndim)

    flops = 2 * padded_batch * (in_size * h1_size
                                + h1_size * h2_pad
                                + h2_pad * out_size)
    bytes_accessed = (_nbytes(x) + _nbytes(w1c) + _nbytes(b1)
                      + _nbytes(w2c) + _nbytes(b2p)
                      + _nbytes(w3c) + _nbytes(b3)
                      + padded_batch * out_size * 4)

    out = pl.pallas_call(
        _dqn_kernel,
        out_shape=jax.ShapeDtypeStruct((padded_batch, out_size), jnp.float32),
        grid=grid,
        in_specs=[
            pl.BlockSpec((tb, in_size), lambda i: (i, 0)),   # x: streamed (f32)
            resident(w1c), resident(b1),
            resident(w2c), resident(b2p),
            resident(w3c), resident(b3),
        ],
        # Narrow output block: last dim == full array dim (legal), avoids 32x
        # HBM write amplification from padding 4 -> 128 lanes.
        out_specs=pl.BlockSpec((tb, out_size), lambda i: (i, 0)),
        compiler_params=pltpu.CompilerParams(
            dimension_semantics=("parallel",)),
        cost_estimate=pl.CostEstimate(flops=flops, transcendentals=0,
                                      bytes_accessed=bytes_accessed),
    )(x, w1c, b1, w2c, b2p, w3c, b3)

    if padded_batch != batch:
        out = out[:batch]
    return out


def dqn_reference(x, w1, b1, w2, b2, w3, b3, compute_dtype=jnp.bfloat16):
    """Pure-JAX reference mirroring the kernel's bf16-operand / f32-accumulate math."""
    cd = compute_dtype
    h1 = jnp.maximum(
        jnp.dot(x.astype(cd), w1.astype(cd),
                preferred_element_type=jnp.float32) + b1, 0.0)
    h2 = jnp.maximum(
        jnp.dot(h1.astype(cd), w2.astype(cd),
                preferred_element_type=jnp.float32) + b2, 0.0)
    return jnp.dot(h2.astype(cd), w3.astype(cd),
                   preferred_element_type=jnp.float32) + b3


if __name__ == "__main__":
    key = jax.random.PRNGKey(0)
    batch, input_size, output_size = 64, 16, 4  # snake state vec -> 4 actions

    k_x, k_p = jax.random.split(key)
    x = jax.random.normal(k_x, (batch, input_size), jnp.float32)
    raw_params = init_dqn_params(k_p, input_size, output_size)

    # One-time pad + bf16 cast (hoisted out of the per-step path).
    prepared = prepare_dqn_params(*raw_params)
    prepared = jax.block_until_ready(prepared)

    # block_batch=32 -> tb=32, grid=(2,) so the batch-tiled pipeline path is exercised.
    out = dqn_forward(x, *prepared, block_batch=32)
    out = jax.block_until_ready(out)

    ref = dqn_reference(x, *raw_params)
    assert out.shape == (batch, output_size)
    assert jnp.allclose(out, ref, atol=1e-2, rtol=1e-2), (
        float(jnp.max(jnp.abs(out - ref))))

    # TODO(synk): for a full DQN training step, fuse the target-network forward,
    # the Q(s,a) gather and the argmax/TD-target arithmetic into this same
    # pallas_call (sharing the streamed x tile and VMEM-resident weights) to
    # halve kernel launches and remove the Q-value HBM round-trip.

    print("KERNEL_OK")
</pallas_src>

<mosaic_0001>
module attributes {stable_mosaic.version = 11 : i64} {
  func.func @_dqn_kernel(%arg0: i32, %arg1: memref<32x16xf32, #tpu.memory_space<vmem>>, %arg2: memref<16x128xbf16, #tpu.memory_space<vmem>>, %arg3: memref<1x128xf32, #tpu.memory_space<vmem>>, %arg4: memref<128x128xbf16, #tpu.memory_space<vmem>>, %arg5: memref<1x128xf32, #tpu.memory_space<vmem>>, %arg6: memref<128x4xbf16, #tpu.memory_space<vmem>>, %arg7: memref<1x4xf32, #tpu.memory_space<vmem>>, %arg8: memref<32x4xf32, #tpu.memory_space<vmem>>) attributes {dimension_semantics = [#tpu.dimension_semantics<parallel>], iteration_bounds = array<i64: 2>, scalar_prefetch = 0 : i64, scratch_operands = 0 : i64, tpu.core_type = #tpu.core_type<tc>, window_params = [{transform_indices = @transform_0, window_bounds = array<i64: 32, 16>}, {pipeline_mode = #tpu.pipeline_mode<synchronous>, transform_indices = @transform_1, window_bounds = array<i64: 16, 128>}, {pipeline_mode = #tpu.pipeline_mode<synchronous>, transform_indices = @transform_2, window_bounds = array<i64: 1, 128>}, {pipeline_mode = #tpu.pipeline_mode<synchronous>, transform_indices = @transform_3, window_bounds = array<i64: 128, 128>}, {pipeline_mode = #tpu.pipeline_mode<synchronous>, transform_indices = @transform_4, window_bounds = array<i64: 1, 128>}, {pipeline_mode = #tpu.pipeline_mode<synchronous>, transform_indices = @transform_5, window_bounds = array<i64: 128, 4>}, {pipeline_mode = #tpu.pipeline_mode<synchronous>, transform_indices = @transform_6, window_bounds = array<i64: 1, 4>}, {transform_indices = @transform_7, window_bounds = array<i64: 32, 4>}]} {
    %c0 = arith.constant 0 : index
    %c0_0 = arith.constant 0 : index
    %0 = vector.load %arg1[%c0, %c0_0] : memref<32x16xf32, #tpu.memory_space<vmem>>, vector<32x16xf32>
    %1 = arith.truncf %0 : vector<32x16xf32> to vector<32x16xbf16>
    %c0_1 = arith.constant 0 : index
    %c0_2 = arith.constant 0 : index
    %2 = vector.load %arg2[%c0_1, %c0_2] : memref<16x128xbf16, #tpu.memory_space<vmem>>, vector<16x128xbf16>
    %cst = arith.constant dense<0.000000e+00> : vector<32x128xf32>
    %3 = tpu.matmul %1, %2, %cst {dimension_numbers = #tpu.dot_dimension_numbers<[1], [0], [0], [1], [0, 0, 1, 1], [], []>} : vector<32x16xbf16>, vector<16x128xbf16>, vector<32x128xf32> -> vector<32x128xf32>
    %c0_3 = arith.constant 0 : index
    %c0_4 = arith.constant 0 : index
    %4 = vector.load %arg3[%c0_3, %c0_4] : memref<1x128xf32, #tpu.memory_space<vmem>>, vector<1x128xf32>
    %5 = vector.broadcast %4 : vector<1x128xf32> to vector<32x128xf32>
    %6 = arith.addf %3, %5 : vector<32x128xf32>
    %cst_5 = arith.constant 0.000000e+00 : f32
    %7 = vector.broadcast %cst_5 : f32 to vector<32x128xf32>
    %8 = arith.maximumf %6, %7 : vector<32x128xf32>
    %9 = arith.truncf %8 : vector<32x128xf32> to vector<32x128xbf16>
    %c0_6 = arith.constant 0 : index
    %c0_7 = arith.constant 0 : index
    %10 = vector.load %arg4[%c0_6, %c0_7] : memref<128x128xbf16, #tpu.memory_space<vmem>>, vector<128x128xbf16>
    %cst_8 = arith.constant dense<0.000000e+00> : vector<32x128xf32>
    %11 = tpu.matmul %9, %10, %cst_8 {dimension_numbers = #tpu.dot_dimension_numbers<[1], [0], [0], [1], [0, 0, 1, 1], [], []>} : vector<32x128xbf16>, vector<128x128xbf16>, vector<32x128xf32> -> vector<32x128xf32>
    %c0_9 = arith.constant 0 : index
    %c0_10 = arith.constant 0 : index
    %12 = vector.load %arg5[%c0_9, %c0_10] : memref<1x128xf32, #tpu.memory_space<vmem>>, vector<1x128xf32>
    %13 = vector.broadcast %12 : vector<1x128xf32> to vector<32x128xf32>
    %14 = arith.addf %11, %13 : vector<32x128xf32>
    %cst_11 = arith.constant 0.000000e+00 : f32
    %15 = vector.broadcast %cst_11 : f32 to vector<32x128xf32>
    %16 = arith.maximumf %14, %15 : vector<32x128xf32>
    %17 = arith.truncf %16 : vector<32x128xf32> to vector<32x128xbf16>
    %c0_12 = arith.constant 0 : index
    %c0_13 = arith.constant 0 : index
    %18 = vector.load %arg6[%c0_12, %c0_13] : memref<128x4xbf16, #tpu.memory_space<vmem>>, vector<128x4xbf16>
    %cst_14 = arith.constant dense<0.000000e+00> : vector<32x4xf32>
    %19 = tpu.matmul %17, %18, %cst_14 {dimension_numbers = #tpu.dot_dimension_numbers<[1], [0], [0], [1], [0, 0, 1, 1], [], []>} : vector<32x128xbf16>, vector<128x4xbf16>, vector<32x4xf32> -> vector<32x4xf32>
    %c0_15 = arith.constant 0 : index
    %c0_16 = arith.constant 0 : index
    %20 = vector.load %arg7[%c0_15, %c0_16] : memref<1x4xf32, #tpu.memory_space<vmem>>, vector<1x4xf32>
    %21 = vector.broadcast %20 : vector<1x4xf32> to vector<32x4xf32>
    %22 = arith.addf %19, %21 : vector<32x4xf32>
    %c0_17 = arith.constant 0 : index
    %c0_18 = arith.constant 0 : index
    %23 = vector.load %arg8[%c0_17, %c0_18] : memref<32x4xf32, #tpu.memory_space<vmem>>, vector<32x4xf32>
    tpu.vector_store %arg8[%c0_17, %c0_18], %22 {strides = array<i32>} : memref<32x4xf32, #tpu.memory_space<vmem>>, vector<32x4xf32>,
    return
  }
  func.func @transform_0(%arg0: i32) -> (i32, i32) {
    %c0_i32 = arith.constant 0 : i32
    %c0_i32_0 = arith.constant 0 : i32
    return %arg0, %c0_i32 : i32, i32
  }
  func.func @transform_1(%arg0: i32) -> (i32, i32) {
    %c0_i32 = arith.constant 0 : i32
    %c0_i32_0 = arith.constant 0 : i32
    %c0_i32_1 = arith.constant 0 : i32
    return %c0_i32, %c0_i32_0 : i32, i32
  }
  func.func @transform_2(%arg0: i32) -> (i32, i32) {
    %c0_i32 = arith.constant 0 : i32
    %c0_i32_0 = arith.constant 0 : i32
    %c0_i32_1 = arith.constant 0 : i32
    return %c0_i32, %c0_i32_0 : i32, i32
  }
  func.func @transform_3(%arg0: i32) -> (i32, i32) {
    %c0_i32 = arith.constant 0 : i32
    %c0_i32_0 = arith.constant 0 : i32
    %c0_i32_1 = arith.constant 0 : i32
    return %c0_i32, %c0_i32_0 : i32, i32
  }
  func.func @transform_4(%arg0: i32) -> (i32, i32) {
    %c0_i32 = arith.constant 0 : i32
    %c0_i32_0 = arith.constant 0 : i32
    %c0_i32_1 = arith.constant 0 : i32
    return %c0_i32, %c0_i32_0 : i32, i32
  }
  func.func @transform_5(%arg0: i32) -> (i32, i32) {
    %c0_i32 = arith.constant 0 : i32
    %c0_i32_0 = arith.constant 0 : i32
    %c0_i32_1 = arith.constant 0 : i32
    return %c0_i32, %c0_i32_0 : i32, i32
  }
  func.func @transform_6(%arg0: i32) -> (i32, i32) {
    %c0_i32 = arith.constant 0 : i32
    %c0_i32_0 = arith.constant 0 : i32
    %c0_i32_1 = arith.constant 0 : i32
    return %c0_i32, %c0_i32_0 : i32, i32
  }
  func.func @transform_7(%arg0: i32) -> (i32, i32) {
    %c0_i32 = arith.constant 0 : i32
    %c0_i32_0 = arith.constant 0 : i32
    return %arg0, %c0_i32 : i32, i32
  }
}

</mosaic_0001>

<llo_original>
// kernel: dqn_forward.1
$region0: #{dqn_forward.1}
  #allocation0 [shape = 'u32[]', space=smem, size = 0x4, offset = 0x4, fixed_abs, tag = 'smem constant byte address 0x4 - core index']
  #allocation1 [shape = 'u32[72,128]{1,0:T(1,128)}', space=vmem, size = 0x9000, scoped, tag = 'internal scratch']
  %s0 = inlined_call_operand.vmem [shape: f32[64,16], index: 0, kind: input, shape index: {}]
  %s1 = inlined_call_operand.vmem [shape: bf16[16,128], index: 1, kind: input, shape index: {}]
  %s2 = inlined_call_operand.vmem [shape: f32[1,128], index: 2, kind: input, shape index: {}]
  %s3 = inlined_call_operand.vmem [shape: bf16[128,128], index: 3, kind: input, shape index: {}]
  %s4 = inlined_call_operand.vmem [shape: f32[1,128], index: 4, kind: input, shape index: {}]
  %s5 = inlined_call_operand.vmem [shape: bf16[128,4], index: 5, kind: input, shape index: {}]
  %s6 = inlined_call_operand.vmem [shape: f32[1,4], index: 6, kind: input, shape index: {}]
  %s7 = inlined_call_operand.vmem [shape: f32[64,4], index: 7, kind: output, shape index: {}]
  %s8 = sld [smem:[#allocation0]]
  $region61: #{dqn_forward.1} parent=0
    _
  %s10 = ssub.s32 1, %s8
  %s11 = scalar_select 0, %s10, %s8
  loop: start=0, step=1, limit=4
  $region2: #{dqn_forward.1} parent=0 // loop_pre_header
    _
  $region3: #{dqn_forward.1} parent=0 // loop_header
    %s13 = sphi 0, %s17
    %p14 = scmp.ge.s32.totalorder %s13, 4
    %s23 = sphi 0, %s25
    %s26 = sphi 0, %s23
    %s27 = sphi 0, %s26
    %s43 = sphi 0, %s27
    %s47 = sphi 0, %s47
    %s49 = sphi 0, %s47
    %s50 = sphi 0, %s49
    %s64 = sphi 0, %s50
    %s68 = sphi 0, %s68
    %s70 = sphi 0, %s68
    %s71 = sphi 0, %s70
    %s85 = sphi 0, %s71
    %s89 = sphi 0, %s89
    %s91 = sphi 0, %s89
    %s92 = sphi 0, %s91
    %s106 = sphi 0, %s92
    %s110 = sphi 0, %s110
    %s112 = sphi 0, %s110
    %s113 = sphi 0, %s112
    %s127 = sphi 0, %s113
    %s131 = sphi 0, %s131
    %s133 = sphi 0, %s131
    %s134 = sphi 0, %s133
    %s148 = sphi 0, %s134
    %s152 = sphi 0, %s152
    %s154 = sphi 0, %s152
    %s155 = sphi 0, %s154
    %s169 = sphi 0, %s155
    %s175 = sphi 0, %s177
    %s178 = sphi 0, %s175
    %s179 = sphi 0, %s178
    %s195 = sphi 0, %s179
  $region4: #{dqn_forward.1} parent=0 // loop_header_branch
    %16 = sbr.rel (%p14) target = $region8
  $region5: #{dqn_forward.1} parent=0 // loop_body
    %s18 = ssub.s32 %s13, 1
    %s19 = ssub.s32 %s13, 2
    %s20 = sadd.s32 %s13, 1
    %s21 = ssub.s32 %s13, %s20
    %p22 = scmp.eq.s32.totalorder %s21, 0
    %s24 = sadd.s32 %s23, 1
    %s25 = scalar_select %p22, %s23, %s24
    %p28 = pneg %p22
    %p29 = scmp.eq.s32.totalorder %s13, 1
    %p30 = por %p28, %p29
    %p31 = scmp.ne.s32.totalorder %s23, %s26
    %p32 = scmp.eq.s32.totalorder %s13, 0
    %p33 = por %p31, %p32
    %p34 = scmp.ne.s32.totalorder %s23, %s26
    %p35 = scmp.eq.s32.totalorder %s18, 1
    %p36 = por %p34, %p35
    %p37 = scmp.ne.s32.totalorder %s26, %s27
    %p38 = scmp.eq.s32.totalorder %s18, 0
    %p39 = por %p37, %p38
    %p40 = scmp.ne.s32.totalorder %s26, %s27
    %p41 = scmp.eq.s32.totalorder %s19, 1
    %p42 = por %p40, %p41
    %p44 = scmp.ne.s32.totalorder %s27, %s43
    %p45 = scmp.eq.s32.totalorder %s19, 0
    %p46 = por %p44, %p45
    %s48 = sadd.s32 %s47, 1
    %p51 = scmp.eq.s32.totalorder %s13, 1
    %p52 = scmp.ne.s32.totalorder %s47, %s49
    %p53 = scmp.eq.s32.totalorder %s13, 0
    %p54 = por %p52, %p53
    %p55 = scmp.ne.s32.totalorder %s47, %s49
    %p56 = scmp.eq.s32.totalorder %s18, 1
    %p57 = por %p55, %p56
    %p58 = scmp.ne.s32.totalorder %s49, %s50
    %p59 = scmp.eq.s32.totalorder %s18, 0
    %p60 = por %p58, %p59
    %p61 = scmp.ne.s32.totalorder %s49, %s50
    %p62 = scmp.eq.s32.totalorder %s19, 1
    %p63 = por %p61, %p62
    %p65 = scmp.ne.s32.totalorder %s50, %s64
    %p66 = scmp.eq.s32.totalorder %s19, 0
    %p67 = por %p65, %p66
    %s69 = sadd.s32 %s68, 1
    %p72 = scmp.eq.s32.totalorder %s13, 1
    %p73 = scmp.ne.s32.totalorder %s68, %s70
    %p74 = scmp.eq.s32.totalorder %s13, 0
    %p75 = por %p73, %p74
    %p76 = scmp.ne.s32.totalorder %s68, %s70
    %p77 = scmp.eq.s32.totalorder %s18, 1
    %p78 = por %p76, %p77
    %p79 = scmp.ne.s32.totalorder %s70, %s71
    %p80 = scmp.eq.s32.totalorder %s18, 0
    %p81 = por %p79, %p80
    %p82 = scmp.ne.s32.totalorder %s70, %s71
    %p83 = scmp.eq.s32.totalorder %s19, 1
    %p84 = por %p82, %p83
    %p86 = scmp.ne.s32.totalorder %s71, %s85
    %p87 = scmp.eq.s32.totalorder %s19, 0
    %p88 = por %p86, %p87
    %s90 = sadd.s32 %s89, 1
    %p93 = scmp.eq.s32.totalorder %s13, 1
    %p94 = scmp.ne.s32.totalorder %s89, %s91
    %p95 = scmp.eq.s32.totalorder %s13, 0
    %p96 = por %p94, %p95
    %p97 = scmp.ne.s32.totalorder %s89, %s91
    %p98 = scmp.eq.s32.totalorder %s18, 1
    %p99 = por %p97, %p98
    %p100 = scmp.ne.s32.totalorder %s91, %s92
    %p101 = scmp.eq.s32.totalorder %s18, 0
    %p102 = por %p100, %p101
    %p103 = scmp.ne.s32.totalorder %s91, %s92
    %p104 = scmp.eq.s32.totalorder %s19, 1
    %p105 = por %p103, %p104
    %p107 = scmp.ne.s32.totalorder %s92, %s106
    %p108 = scmp.eq.s32.totalorder %s19, 0
    %p109 = por %p107, %p108
    %s111 = sadd.s32 %s110, 1
    %p114 = scmp.eq.s32.totalorder %s13, 1
    %p115 = scmp.ne.s32.totalorder %s110, %s112
    %p116 = scmp.eq.s32.totalorder %s13, 0
    %p117 = por %p115, %p116
    %p118 = scmp.ne.s32.totalorder %s110, %s112
    %p119 = scmp.eq.s32.totalorder %s18, 1
    %p120 = por %p118, %p119
    %p121 = scmp.ne.s32.totalorder %s112, %s113
    %p122 = scmp.eq.s32.totalorder %s18, 0
    %p123 = por %p121, %p122
    %p124 = scmp.ne.s32.totalorder %s112, %s113
    %p125 = scmp.eq.s32.totalorder %s19, 1
    %p126 = por %p124, %p125
    %p128 = scmp.ne.s32.totalorder %s113, %s127
    %p129 = scmp.eq.s32.totalorder %s19, 0
    %p130 = por %p128, %p129
    %s132 = sadd.s32 %s131, 1
    %p135 = scmp.eq.s32.totalorder %s13, 1
    %p136 = scmp.ne.s32.totalorder %s131, %s133
    %p137 = scmp.eq.s32.totalorder %s13, 0
    %p138 = por %p136, %p137
    %p139 = scmp.ne.s32.totalorder %s131, %s133
    %p140 = scmp.eq.s32.totalorder %s18, 1
    %p141 = por %p139, %p140
    %p142 = scmp.ne.s32.totalorder %s133, %s134
    %p143 = scmp.eq.s32.totalorder %s18, 0
    %p144 = por %p142, %p143
    %p145 = scmp.ne.s32.totalorder %s133, %s134
    %p146 = scmp.eq.s32.totalorder %s19, 1
    %p147 = por %p145, %p146
    %p149 = scmp.ne.s32.totalorder %s134, %s148
    %p150 = scmp.eq.s32.totalorder %s19, 0
    %p151 = por %p149, %p150
    %s153 = sadd.s32 %s152, 1
    %p156 = scmp.eq.s32.totalorder %s13, 1
    %p157 = scmp.ne.s32.totalorder %s152, %s154
    %p158 = scmp.eq.s32.totalorder %s13, 0
    %p159 = por %p157, %p158
    %p160 = scmp.ne.s32.totalorder %s152, %s154
    %p161 = scmp.eq.s32.totalorder %s18, 1
    %p162 = por %p160, %p161
    %p163 = scmp.ne.s32.totalorder %s154, %s155
    %p164 = scmp.eq.s32.totalorder %s18, 0
    %p165 = por %p163, %p164
    %p166 = scmp.ne.s32.totalorder %s154, %s155
    %p167 = scmp.eq.s32.totalorder %s19, 1
    %p168 = por %p166, %p167
    %p170 = scmp.ne.s32.totalorder %s155, %s169
    %p171 = scmp.eq.s32.totalorder %s19, 0
    %p172 = por %p170, %p171
    %s173 = ssub.s32 %s13, %s20
    %p174 = scmp.eq.s32.totalorder %s173, 0
    %s176 = sadd.s32 %s175, 1
    %s177 = scalar_select %p174, %s175, %s176
    %p180 = pneg %p174
    %p181 = scmp.eq.s32.totalorder %s13, 1
    %p182 = por %p180, %p181
    %p183 = scmp.ne.s32.totalorder %s175, %s178
    %p184 = scmp.eq.s32.totalorder %s13, 0
    %p185 = por %p183, %p184
    %p186 = scmp.ne.s32.totalorder %s175, %s178
    %p187 = scmp.eq.s32.totalorder %s18, 1
    %p188 = por %p186, %p187
    %p189 = scmp.ne.s32.totalorder %s178, %s179
    %p190 = scmp.eq.s32.totalorder %s18, 0
    %p191 = por %p189, %p190
    %p192 = scmp.ne.s32.totalorder %s178, %s179
    %p193 = scmp.eq.s32.totalorder %s19, 1
    %p194 = por %p192, %p193
    %p196 = scmp.ne.s32.totalorder %s179, %s195
    %p197 = scmp.eq.s32.totalorder %s19, 0
    %p198 = por %p196, %p197
    %p199 = scmp.le.s32.totalorder 1, %s13
    %p200 = scmp.lt.s32.totalorder %s13, 3
    %p201 = pnand %p199, %p200
    %p202 = pneg %p201
    // Predicated region
    $region9: #{dqn_forward.1} parent=5 // pred_check
      _
    $region10: #{dqn_forward.1} parent=5 // pred_check_branch
      %204 = sbr.rel (%p201) target = $region12
    $region11: #{dqn_forward.1} parent=5 // pred_region
      %s205 = ssub.s32 %s13, 1
      // Predicated region
      $region13: #{dqn_forward.1} parent=11 // pred_check
        %p206 = pneg %p60
      $region14: #{dqn_forward.1} parent=11 // pred_check_branch
        %208 = sbr.rel (%p206) target = $region16
      $region15: #{dqn_forward.1} parent=11 // pred_region
        _
      $region16: #{dqn_forward.1} parent=11 // pred_fallthru
        _
      // Predicated region
      $region17: #{dqn_forward.1} parent=11 // pred_check
        %p209 = pneg %p81
      $region18: #{dqn_forward.1} parent=11 // pred_check_branch
        %211 = sbr.rel (%p209) target = $region20
      $region19: #{dqn_forward.1} parent=11 // pred_region
        _
      $region20: #{dqn_forward.1} parent=11 // pred_fallthru
        _
      // Predicated region
      $region21: #{dqn_forward.1} parent=11 // pred_check
        %p212 = pneg %p102
      $region22: #{dqn_forward.1} parent=11 // pred_check_branch
        %214 = sbr.rel (%p212) target = $region24
      $region23: #{dqn_forward.1} parent=11 // pred_region
        _
      $region24: #{dqn_forward.1} parent=11 // pred_fallthru
        _
      // Predicated region
      $region25: #{dqn_forward.1} parent=11 // pred_check
        %p215 = pneg %p123
      $region26: #{dqn_forward.1} parent=11 // pred_check_branch
        %217 = sbr.rel (%p215) target = $region28
      $region27: #{dqn_forward.1} parent=11 // pred_region
        _
      $region28: #{dqn_forward.1} parent=11 // pred_fallthru
        _
      // Predicated region
      $region29: #{dqn_forward.1} parent=11 // pred_check
        %p218 = pneg %p144
      $region30: #{dqn_forward.1} parent=11 // pred_check_branch
        %220 = sbr.rel (%p218) target = $region32
      $region31: #{dqn_forward.1} parent=11 // pred_region
        _
      $region32: #{dqn_forward.1} parent=11 // pred_fallthru
        _
      // Predicated region
      $region33: #{dqn_forward.1} parent=11 // pred_check
        %p221 = pneg %p165
      $region34: #{dqn_forward.1} parent=11 // pred_check_branch
        %223 = sbr.rel (%p221) target = $region36
      $region35: #{dqn_forward.1} parent=11 // pred_region
        _
      $region36: #{dqn_forward.1} parent=11 // pred_fallthru
        _
    $region12: #{dqn_forward.1} parent=5 // pred_fallthru
      _
    %p224 = scmp.lt.s32.totalorder %s13, 2
    // Predicated region
    $region37: #{dqn_forward.1} parent=5 // pred_check
      %p225 = pneg %p224
    $region38: #{dqn_forward.1} parent=5 // pred_check_branch
      %227 = sbr.rel (%p225) target = $region40
    $region39: #{dqn_forward.1} parent=5 // pred_region
      // Predicated region
      $region41: #{dqn_forward.1} parent=39 // pred_check
        %p228 = pneg %p33
      $region42: #{dqn_forward.1} parent=39 // pred_check_branch
        %230 = sbr.rel (%p228) target = $region44
      $region43: #{dqn_forward.1} parent=39 // pred_region
        %s231 = smul.u32 4, %s13
        %p232 = scmp.lt.s32.totalorder %s231, 7
        %s233 = scalar_select %p232, %s231, 7
        %s234 = smul.addr %s233, 8
        %s235 = scalar_lea.vmem %s0, %s234
        %s236 = smul.u32 4, %s13
      $region44: #{dqn_forward.1} parent=39 // pred_fallthru
        _
    $region40: #{dqn_forward.1} parent=5 // pred_fallthru
      _
    %p237 = scmp.le.s32.totalorder 1, %s13
    %p238 = scmp.lt.s32.totalorder %s13, 3
    %p239 = pnand %p237, %p238
    %p240 = pneg %p239
    // Predicated region
    $region45: #{dqn_forward.1} parent=5 // pred_check
      _
    $region46: #{dqn_forward.1} parent=5 // pred_check_branch
      %242 = sbr.rel (%p239) target = $region48
    $region47: #{dqn_forward.1} parent=5 // pred_region
      %s243 = ssub.s32 %s13, 1
      %s244 = smul.u32 4, %s18
      %p245 = scmp.lt.s32.totalorder %s244, 7
      %s246 = scalar_select %p245, %s244, 7
      %s247 = smul.addr %s246, 8
      %s248 = scalar_lea.vmem %s0, %s247
      %p249 = pneg %p39
      %p250 = pneg %p36
      %p251 = pneg %p60
      %p252 = pneg %p57
      %p253 = pneg %p81
      %p254 = pneg %p78
      %p255 = pneg %p102
      %p256 = pneg %p99
      %p257 = pneg %p123
      %p258 = pneg %p120
      %p259 = pneg %p144
      %p260 = pneg %p141
      %p261 = pneg %p165
      %p262 = pneg %p162
      %p263 = pneg %p191
      %p264 = pneg %p188
      %s265 = smul.u32 4, %s18
      %p266 = scmp.lt.s32.totalorder %s265, 7
      %s267 = scalar_select %p266, %s265, 7
      %s268 = smul.addr %s267, 8
      %s269 = scalar_lea.vmem %s7, %s268
      %s270 = smul.u32 4, %s18
      %p271 = scmp.lt.s32.totalorder %s270, 7
      %s272 = scalar_select %p271, %s270, 7
      %s273 = smul.addr %s272, 8
      %s274 = scalar_lea.vmem %s0, %s273
      %s275 = smul.u32 4, %s18
      %s276 = smul.u32 4, %s18
      %p277 = scmp.lt.s32.totalorder %s276, 7
      %s278 = scalar_select %p277, %s276, 7
      %s279 = smul.addr %s278, 8
      %s280 = scalar_lea.vmem %s7, %s279
      %s281 = smul.u32 4, %s18
      %v283 = vld [vmem:[%s274] sm:$0xff]
      %v284 = vld [vmem:[%s274 + $0x8] sm:$0xff]
      %v285 = vld [vmem:[%s274 + $0x10] sm:$0xff]
      %v286 = vld [vmem:[%s274 + $0x18] sm:$0xff]
      %v287 = vpack.c.bf16 %v284, %v283
      %v288 = vpack.c.bf16 %v286, %v285
      %v289 = vld [vmem:[%s1] sm:$0xf]
      %v290 = vld [vmem:[%s1 + $0x4] sm:$0xf]
      %v291 = vld [vmem:[%s2] sm:$0x1]
      %v293 = vperm.slane %v291, 0
      %v297 = vunpack.c.l.b16 %v289
      %v298 = vunpack.c.l.b16 %v290
      %v299 = vpack.c.b16 %v298, %v297
      %vm301 = vcmask 130048
      %v303 = vsel %vm301, %v287, 0
      %v306 = vsel %vm301, %v288, 0
      %308 = vmatpush.bf16.msra.mxu0 0
      %309 = vmatpush.bf16.msra.mxu0 0
      %310 = vmatpush.bf16.msra.mxu0 0
      %311 = vmatpush.bf16.msra.mxu0 0
      %312 = vmatpush.bf16.msra.mxu0 0
      %313 = vmatpush.bf16.msra.mxu0 0
      %314 = vmatpush.bf16.msra.mxu0 0
      %315 = vmatpush.bf16.msra.mxu0 %v299
      %316 = vmatmul.bf16.gmra.mxu0 %v303
      %v317 = vpop.f32.mrf.mxu0
      %v318 = vadd.f32 %v293, %v317
      %v319 = vpop.f32.mrf.mxu0
      %v320 = vadd.f32 %v293, %v319
      %321 = vmatmul.bf16.gmra.mxu0 %v306
      %v322 = vpop.f32.mrf.mxu0
      %v323 = vadd.f32 %v293, %v322
      %v324 = vpop.f32.mrf.mxu0
      %v325 = vadd.f32 %v293, %v324
      %326 = vdwg.mxu0
      %v327 = vmax.f32 %v318, 0.0
      %v328 = vmax.f32 %v320, 0.0
      %v329 = vmax.f32 %v323, 0.0
      %v330 = vmax.f32 %v325, 0.0
      %v331 = vpack.c.bf16 %v328, %v327
      %v332 = vpack.c.bf16 %v330, %v329
      %v333 = vld [vmem:[%s3] sm:$0xf]
      %v334 = vld [vmem:[%s3 + $0x4] sm:$0xf]
      %v335 = vld [vmem:[%s3 + $0x8] sm:$0xf]
      %v336 = vld [vmem:[%s3 + $0xc] sm:$0xf]
      %v337 = vld [vmem:[%s3 + $0x10] sm:$0xf]
      %v338 = vld [vmem:[%s3 + $0x14] sm:$0xf]
      %v339 = vld [vmem:[%s3 + $0x18] sm:$0xf]
      %v340 = vld [vmem:[%s3 + $0x1c] sm:$0xf]
      %v341 = vld [vmem:[%s3 + $0x20] sm:$0xf]
      %v342 = vld [vmem:[%s3 + $0x24] sm:$0xf]
      %v343 = vld [vmem:[%s3 + $0x28] sm:$0xf]
      %v344 = vld [vmem:[%s3 + $0x2c] sm:$0xf]
      %v345 = vld [vmem:[%s3 + $0x30] sm:$0xf]
      %v346 = vld [vmem:[%s3 + $0x34] sm:$0xf]
      %v347 = vld [vmem:[%s3 + $0x38] sm:$0xf]
      %v348 = vld [vmem:[%s3 + $0x3c] sm:$0xf]
      %v349 = vld [vmem:[%s4] sm:$0x1]
      %v351 = vperm.slane %v349, 0
      %v369 = vunpack.c.l.b16 %v333
      %v370 = vunpack.c.l.b16 %v334
      %v371 = vunpack.c.l.b16 %v335
      %v372 = vunpack.c.l.b16 %v336
      %v373 = vunpack.c.l.b16 %v337
      %v374 = vunpack.c.l.b16 %v338
      %v375 = vunpack.c.l.b16 %v339
      %v376 = vunpack.c.l.b16 %v340
      %v377 = vunpack.c.l.b16 %v341
      %v378 = vunpack.c.l.b16 %v342
      %v379 = vunpack.c.l.b16 %v343
      %v380 = vunpack.c.l.b16 %v344
      %v381 = vunpack.c.l.b16 %v345
      %v382 = vunpack.c.l.b16 %v346
      %v383 = vunpack.c.l.b16 %v347
      %v384 = vunpack.c.l.b16 %v348
      %v385 = vpack.c.b16 %v370, %v369
      %v386 = vpack.c.b16 %v372, %v371
      %v387 = vpack.c.b16 %v374, %v373
      %v388 = vpack.c.b16 %v376, %v375
      %v389 = vpack.c.b16 %v378, %v377
      %v390 = vpack.c.b16 %v380, %v379
      %v391 = vpack.c.b16 %v382, %v381
      %v392 = vpack.c.b16 %v384, %v383
      %401 = vmatpush.bf16.msra.mxu0 %v392
      %402 = vmatpush.bf16.msra.mxu0 %v391
      %403 = vmatpush.bf16.msra.mxu0 %v390
      %404 = vmatpush.bf16.msra.mxu0 %v389
      %405 = vmatpush.bf16.msra.mxu0 %v388
      %406 = vmatpush.bf16.msra.mxu0 %v387
      %407 = vmatpush.bf16.msra.mxu0 %v386
      %408 = vmatpush.bf16.msra.mxu0 %v385
      %409 = vmatmul.bf16.gmra.mxu0 %v331
      %v410 = vpop.f32.mrf.mxu0
      %v411 = vadd.f32 %v351, %v410
      %v412 = vpop.f32.mrf.mxu0
      %v413 = vadd.f32 %v351, %v412
      %414 = vmatmul.bf16.gmra.mxu0 %v332
      %v415 = vpop.f32.mrf.mxu0
      %v416 = vadd.f32 %v351, %v415
      %v417 = vpop.f32.mrf.mxu0
      %v418 = vadd.f32 %v351, %v417
      %419 = vdwg.mxu0
      %v420 = vmax.f32 %v411, 0.0
      %v421 = vmax.f32 %v413, 0.0
      %v422 = vmax.f32 %v416, 0.0
      %v423 = vmax.f32 %v418, 0.0
      %v424 = vpack.c.bf16 %v421, %v420
      %v425 = vpack.c.bf16 %v423, %v422
      %v426 = vld [vmem:[%s5] sm:$0xf]
      %v427 = vld [vmem:[%s5 + $0x4] sm:$0xf]
      %v428 = vld [vmem:[%s5 + $0x8] sm:$0xf]
      %v429 = vld [vmem:[%s5 + $0xc] sm:$0xf]
      %v430 = vld [vmem:[%s5 + $0x10] sm:$0xf]
      %v431 = vld [vmem:[%s5 + $0x14] sm:$0xf]
      %v432 = vld [vmem:[%s5 + $0x18] sm:$0xf]
      %v433 = vld [vmem:[%s5 + $0x1c] sm:$0xf]
      %v434 = vld [vmem:[%s5 + $0x20] sm:$0xf]
      %v435 = vld [vmem:[%s5 + $0x24] sm:$0xf]
      %v436 = vld [vmem:[%s5 + $0x28] sm:$0xf]
      %v437 = vld [vmem:[%s5 + $0x2c] sm:$0xf]
      %v438 = vld [vmem:[%s5 + $0x30] sm:$0xf]
      %v439 = vld [vmem:[%s5 + $0x34] sm:$0xf]
      %v440 = vld [vmem:[%s5 + $0x38] sm:$0xf]
      %v441 = vld [vmem:[%s5 + $0x3c] sm:$0xf]
      %v442 = vld [vmem:[%s6] sm:$0x1]
      %v444 = vperm.slane %v442, 0
      %v462 = vunpack.c.l.b16 %v426
      %v463 = vunpack.c.l.b16 %v427
      %v464 = vunpack.c.l.b16 %v428
      %v465 = vunpack.c.l.b16 %v429
      %v466 = vunpack.c.l.b16 %v430
      %v467 = vunpack.c.l.b16 %v431
      %v468 = vunpack.c.l.b16 %v432
      %v469 = vunpack.c.l.b16 %v433
      %v470 = vunpack.c.l.b16 %v434
      %v471 = vunpack.c.l.b16 %v435
      %v472 = vunpack.c.l.b16 %v436
      %v473 = vunpack.c.l.b16 %v437
      %v474 = vunpack.c.l.b16 %v438
      %v475 = vunpack.c.l.b16 %v439
      %v476 = vunpack.c.l.b16 %v440
      %v477 = vunpack.c.l.b16 %v441
      %v478 = vpack.c.b16 %v463, %v462
      %v479 = vpack.c.b16 %v465, %v464
      %v480 = vpack.c.b16 %v467, %v466
      %v481 = vpack.c.b16 %v469, %v468
      %v482 = vpack.c.b16 %v471, %v470
      %v483 = vpack.c.b16 %v473, %v472
      %v484 = vpack.c.b16 %v475, %v474
      %v485 = vpack.c.b16 %v477, %v476
      %494 = vmatpush.bf16.msra.mxu0 %v485
      %495 = vmatpush.bf16.msra.mxu0 %v484
      %496 = vmatpush.bf16.msra.mxu0 %v483
      %497 = vmatpush.bf16.msra.mxu0 %v482
      %498 = vmatpush.bf16.msra.mxu0 %v481
      %499 = vmatpush.bf16.msra.mxu0 %v480
      %500 = vmatpush.bf16.msra.mxu0 %v479
      %501 = vmatpush.bf16.msra.mxu0 %v478
      %502 = vmatmul.bf16.gmra.mxu0 %v424
      %v503 = vpop.f32.mrf.mxu0
      %v504 = vadd.f32 %v444, %v503
      %v505 = vpop.f32.mrf.mxu0
      %v506 = vadd.f32 %v444, %v505
      %507 = vmatmul.bf16.gmra.mxu0 %v425
      %v508 = vpop.f32.mrf.mxu0
      %v509 = vadd.f32 %v444, %v508
      %v510 = vpop.f32.mrf.mxu0
      %v511 = vadd.f32 %v444, %v510
      %512 = vdwg.mxu0
      %vm513 = vcmask 31744
      %514 = vst.msk [vmem:[%s280] sm:$0xff] %vm513, %v504
      %515 = vst.msk [vmem:[%s280 + $0x8] sm:$0xff] %vm513, %v506
      %516 = vst.msk [vmem:[%s280 + $0x10] sm:$0xff] %vm513, %v509
      %517 = vst.msk [vmem:[%s280 + $0x18] sm:$0xff] %vm513, %v511
      %s518 = smul.u32 4, %s18
      %p519 = scmp.lt.s32.totalorder %s518, 7
      %s520 = scalar_select %p519, %s518, 7
      %s521 = smul.addr %s520, 8
      %s522 = scalar_lea.vmem %s7, %s521
      // Predicated region
      $region49: #{dqn_forward.1} parent=47 // pred_check
        %p523 = pneg %p188
      $region50: #{dqn_forward.1} parent=47 // pred_check_branch
        %525 = sbr.rel (%p523) target = $region52
      $region51: #{dqn_forward.1} parent=47 // pred_region
        %s526 = smul.u32 4, %s18
      $region52: #{dqn_forward.1} parent=47 // pred_fallthru
        _
    $region48: #{dqn_forward.1} parent=5 // pred_fallthru
      _
    %p527 = scmp.le.s32.totalorder 2, %s13
    // Predicated region
    $region53: #{dqn_forward.1} parent=5 // pred_check
      %p528 = pneg %p527
    $region54: #{dqn_forward.1} parent=5 // pred_check_branch
      %530 = sbr.rel (%p528) target = $region56
    $region55: #{dqn_forward.1} parent=5 // pred_region
      %s531 = ssub.s32 %s13, 2
      // Predicated region
      $region57: #{dqn_forward.1} parent=55 // pred_check
        %p532 = pneg %p194
      $region58: #{dqn_forward.1} parent=55 // pred_check_branch
        %534 = sbr.rel (%p532) target = $region60
      $region59: #{dqn_forward.1} parent=55 // pred_region
        %s535 = smul.u32 4, %s19
        %p536 = scmp.lt.s32.totalorder %s535, 7
        %s537 = scalar_select %p536, %s535, 7
        %s538 = smul.addr %s537, 8
        %s539 = scalar_lea.vmem %s7, %s538
      $region60: #{dqn_forward.1} parent=55 // pred_fallthru
        _
    $region56: #{dqn_forward.1} parent=5 // pred_fallthru
      _
  $region6: #{dqn_forward.1} parent=0 // loop_footer
    %s17 = sadd.s32 1, %s13
  $region7: #{dqn_forward.1} parent=0 // loop_footer_branch
    %12 = sbr.rel target = $region3
  $region8: #{dqn_forward.1} parent=0 // loop_exit
    _

</llo_original>
